<compile_context>
chip_gen: v7x
topology: tpu7x:2x2x1
jax: 0.10.0
libtpu: 0.0.40
codegen_flags: <defaults>
</compile_context>

<pallas_src>
import numpy as np
import jax
import jax.numpy as jnp
from jax.experimental import pallas as pl


# ----------------------------- configuration ------------------------------
B = 2
Z_DIM, VIEW = 8, 32          # layer_dim_list[0] = (z_dim, view_size)
C1, K1, S1 = 16, 4, 1        # layer_dim_list[1] = (view, C1, K1, S1)
C2, K2, S2 = 4, 4, 2         # layer_dim_list[2] = (C1, C2, K2, S2)

H0 = W0 = 1                  # decoder input spatial (z as (B, z_dim, 1, 1))
H1 = (H0 - 1) * S1 + K1      # 4
W1 = (W0 - 1) * S1 + K1      # 4
H2 = (H1 - 1) * S2 + K2      # 10
W2 = (W1 - 1) * S2 + K2      # 10
P1, P2 = H1 * W1, H2 * W2    # 16, 100

N1 = P1 * C1                 # 256  (layer-1 flattened output width)
N2 = P2 * C2                 # 400  (layer-2 flattened output width)
N2_PAD = 512                 # lane-dense padded output width (multiple of 128)


def make_scatter(h_in, w_in, k, stride):
    """0/1 scatter matrices S[t, out_pixel, in_pixel] encoding ConvTranspose2d
    (padding=0, output_padding=0, dilation=1) output placement for tap t=(kh,kw)."""
    h_out = (h_in - 1) * stride + k
    w_out = (w_in - 1) * stride + k
    s = np.zeros((k * k, h_out * w_out, h_in * w_in), np.float32)
    for kh in range(k):
        for kw in range(k):
            t = kh * k + kw
            for ih in range(h_in):
                for iw in range(w_in):
                    oh, ow = ih * stride + kh, iw * stride + kw
                    s[t, oh * w_out + ow, ih * w_in + iw] = 1.0
    return s


# ------------------------------ Pallas kernel ------------------------------
def decoder_kernel(x_ref, w0_ref, b0_ref, w1_ref, b1_ref, m_ref, b2_ref, o_ref):
    # Conv2d(z_dim, view, kernel=1) on 1x1 spatial  ->  (B, VIEW) matmul + ReLU
    h0 = jnp.dot(x_ref[...], w0_ref[...],
                 preferred_element_type=jnp.float32) + b0_ref[...]        # (B, VIEW)
    h0 = jnp.maximum(h0, 0.0)

    # ConvTranspose2d(view, C1, K1, S1) on 1x1 input == one matmul (taps pre-flattened)
    h1 = jnp.dot(h0, w1_ref[...],
                 preferred_element_type=jnp.float32) + b1_ref[...]        # (B, 256)
    h1 = jnp.maximum(h1, 0.0)

    # ConvTranspose2d(C1, C2, K2, S2): taps + scatter pre-folded into M (256, 512)
    y2 = jnp.dot(h1, m_ref[...],
                 preferred_element_type=jnp.float32) + b2_ref[...]        # (B, 512)

    o_ref[...] = y2.astype(o_ref.dtype)                                   # lane-dense store


def conv_decoder_forward(x_nchw, params):
    """x_nchw: (B, z_dim, 1, 1).  Returns (B, C2, H2, W2) matching PyTorch."""
    w0_k, b0_k, w1_flat, b1_flat, m_pad, b2_pad = params
    x_kern = x_nchw.reshape(B, Z_DIM).astype(jnp.float32)                 # (B, z_dim)

    out_flat = pl.pallas_call(
        decoder_kernel,
        out_shape=jax.ShapeDtypeStruct((B, N2_PAD), jnp.float32),
    )(x_kern, w0_k, b0_k, w1_flat, b1_flat, m_pad, b2_pad)                # (B, 512)

    out = out_flat[:, :N2].reshape(B, H2, W2, C2)                         # NHWC
    return jnp.transpose(out, (0, 3, 1, 2))                               # -> NCHW


def prepare_params(w0_t, b0_t, w1_t, b1_t, w2_t, b2_t):
    """Fold PyTorch-layout weights into the kernel's two fused matmul operands."""
    # Conv2d 1x1: (VIEW, Z_DIM, 1, 1) -> (Z_DIM, VIEW)
    w0_k = jnp.transpose(w0_t[:, :, 0, 0], (1, 0))
    b0_k = b0_t[None, :]

    # Layer-1 ConvTranspose (1x1 input): output pixel == tap, so the scatter is an
    # identity permutation. W1_flat[i, (kh*K1+kw)*C1 + o] = w1[i, o, kh, kw].
    w1_flat = jnp.transpose(w1_t, (0, 2, 3, 1)).reshape(VIEW, N1)          # (32, 256)
    b1_flat = jnp.tile(b1_t, P1)[None, :]                                  # (1, 256)

    # Layer-2 ConvTranspose: fold taps + weights + 0/1 scatter into one matrix.
    # M[p*C1+i, q*C2+o] = sum_t s2[t, q, p] * w2[i, o, kh, kw]
    s2 = make_scatter(H1, W1, K2, S2)                                      # (16, 100, 16)
    w2_tio = np.transpose(np.asarray(w2_t), (2, 3, 0, 1)).reshape(K2 * K2, C1, C2)
    m = np.einsum('tqp,tio->piqo', s2, w2_tio).reshape(N1, N2)             # (256, 400)
    m_pad = np.zeros((N1, N2_PAD), np.float32)
    m_pad[:, :N2] = m                                                      # pad to 512 lanes
    b2_pad = np.zeros((1, N2_PAD), np.float32)
    b2_pad[0, :N2] = np.tile(np.asarray(b2_t), P2)

    return (w0_k.astype(jnp.float32), b0_k.astype(jnp.float32),
            w1_flat.astype(jnp.float32), b1_flat.astype(jnp.float32),
            jnp.asarray(m_pad), jnp.asarray(b2_pad))


# ----------------------------- numpy reference -----------------------------
def ref_conv1x1(x, w, b):  # x (B,Ci,H,W), w (Co,Ci,1,1), b (Co,)
    return np.einsum('bihw,oi->bohw', x, w[:, :, 0, 0]) + b[None, :, None, None]


def ref_convT(x, w, b, stride):  # x (B,Ci,H,W), w (Ci,Co,K,K) (torch layout), b (Co,)
    b_, ci, h, wd = x.shape
    _, co, k, _ = w.shape
    ho, wo = (h - 1) * stride + k, (wd - 1) * stride + k
    y = np.zeros((b_, co, ho, wo), np.float32)
    for ih in range(h):
        for iw in range(wd):
            oh, ow = ih * stride, iw * stride
            y[:, :, oh:oh + k, ow:ow + k] += np.einsum('bi,iokl->bokl', x[:, :, ih, iw], w)
    return y + b[None, :, None, None]


# --------------------------------- main ------------------------------------
if __name__ == "__main__":
    key = jax.random.PRNGKey(0)
    ks = jax.random.split(key, 8)

    # PyTorch-layout parameters (deterministic synthetic init)
    w0_t = jax.random.normal(ks[0], (VIEW, Z_DIM, 1, 1), jnp.float32) * 0.1
    b0_t = jax.random.normal(ks[1], (VIEW,), jnp.float32) * 0.1
    w1_t = jax.random.normal(ks[2], (VIEW, C1, K1, K1), jnp.float32) * 0.1
    b1_t = jax.random.normal(ks[3], (C1,), jnp.float32) * 0.1
    w2_t = jax.random.normal(ks[4], (C1, C2, K2, K2), jnp.float32) * 0.1
    b2_t = jax.random.normal(ks[5], (C2,), jnp.float32) * 0.1
    x = jax.random.normal(ks[6], (B, Z_DIM, 1, 1), jnp.float32)

    params = prepare_params(w0_t, b0_t, w1_t, b1_t, w2_t, b2_t)

    out = conv_decoder_forward(x, params)
    out = jax.block_until_ready(out)

    # Reference check (pure numpy, PyTorch semantics)
    xn = np.asarray(x)
    h = np.maximum(ref_conv1x1(xn, np.asarray(w0_t), np.asarray(b0_t)), 0.0)
    h = np.maximum(ref_convT(h, np.asarray(w1_t), np.asarray(b1_t), S1), 0.0)
    ref = ref_convT(h, np.asarray(w2_t), np.asarray(b2_t), S2)

    assert out.shape == (B, C2, H2, W2), out.shape
    np.testing.assert_allclose(np.asarray(out), ref, rtol=1e-4, atol=1e-4)
    print("KERNEL_OK")
</pallas_src>

<mosaic_0001>
module attributes {stable_mosaic.version = 11 : i64} {
  func.func @decoder_kernel(%arg0: memref<2x8xf32, #tpu.memory_space<vmem>>, %arg1: memref<8x32xf32, #tpu.memory_space<vmem>>, %arg2: memref<1x32xf32, #tpu.memory_space<vmem>>, %arg3: memref<32x256xf32, #tpu.memory_space<vmem>>, %arg4: memref<1x256xf32, #tpu.memory_space<vmem>>, %arg5: memref<256x512xf32, #tpu.memory_space<vmem>>, %arg6: memref<1x512xf32, #tpu.memory_space<vmem>>, %arg7: memref<2x512xf32, #tpu.memory_space<vmem>>) attributes {dimension_semantics = [], scalar_prefetch = 0 : i64, scratch_operands = 0 : i64, tpu.core_type = #tpu.core_type<tc>} {
    %c0 = arith.constant 0 : index
    %c0_0 = arith.constant 0 : index
    %0 = vector.load %arg0[%c0, %c0_0] : memref<2x8xf32, #tpu.memory_space<vmem>>, vector<2x8xf32>
    %c0_1 = arith.constant 0 : index
    %c0_2 = arith.constant 0 : index
    %1 = vector.load %arg1[%c0_1, %c0_2] : memref<8x32xf32, #tpu.memory_space<vmem>>, vector<8x32xf32>
    %cst = arith.constant dense<0.000000e+00> : vector<2x32xf32>
    %2 = tpu.matmul %0, %1, %cst {dimension_numbers = #tpu.dot_dimension_numbers<[1], [0], [0], [1], [0, 0, 1, 1], [], []>} : vector<2x8xf32>, vector<8x32xf32>, vector<2x32xf32> -> vector<2x32xf32>
    %c0_3 = arith.constant 0 : index
    %c0_4 = arith.constant 0 : index
    %3 = vector.load %arg2[%c0_3, %c0_4] : memref<1x32xf32, #tpu.memory_space<vmem>>, vector<1x32xf32>
    %4 = vector.broadcast %3 : vector<1x32xf32> to vector<2x32xf32>
    %5 = arith.addf %2, %4 : vector<2x32xf32>
    %cst_5 = arith.constant 0.000000e+00 : f32
    %6 = vector.broadcast %cst_5 : f32 to vector<2x32xf32>
    %7 = arith.maximumf %5, %6 : vector<2x32xf32>
    %c0_6 = arith.constant 0 : index
    %c0_7 = arith.constant 0 : index
    %8 = vector.load %arg3[%c0_6, %c0_7] : memref<32x256xf32, #tpu.memory_space<vmem>>, vector<32x256xf32>
    %cst_8 = arith.constant dense<0.000000e+00> : vector<2x256xf32>
    %9 = tpu.matmul %7, %8, %cst_8 {dimension_numbers = #tpu.dot_dimension_numbers<[1], [0], [0], [1], [0, 0, 1, 1], [], []>} : vector<2x32xf32>, vector<32x256xf32>, vector<2x256xf32> -> vector<2x256xf32>
    %c0_9 = arith.constant 0 : index
    %c0_10 = arith.constant 0 : index
    %10 = vector.load %arg4[%c0_9, %c0_10] : memref<1x256xf32, #tpu.memory_space<vmem>>, vector<1x256xf32>
    %11 = vector.broadcast %10 : vector<1x256xf32> to vector<2x256xf32>
    %12 = arith.addf %9, %11 : vector<2x256xf32>
    %cst_11 = arith.constant 0.000000e+00 : f32
    %13 = vector.broadcast %cst_11 : f32 to vector<2x256xf32>
    %14 = arith.maximumf %12, %13 : vector<2x256xf32>
    %c0_12 = arith.constant 0 : index
    %c0_13 = arith.constant 0 : index
    %15 = vector.load %arg5[%c0_12, %c0_13] : memref<256x512xf32, #tpu.memory_space<vmem>>, vector<256x512xf32>
    %cst_14 = arith.constant dense<0.000000e+00> : vector<2x512xf32>
    %16 = tpu.matmul %14, %15, %cst_14 {dimension_numbers = #tpu.dot_dimension_numbers<[1], [0], [0], [1], [0, 0, 1, 1], [], []>} : vector<2x256xf32>, vector<256x512xf32>, vector<2x512xf32> -> vector<2x512xf32>
    %c0_15 = arith.constant 0 : index
    %c0_16 = arith.constant 0 : index
    %17 = vector.load %arg6[%c0_15, %c0_16] : memref<1x512xf32, #tpu.memory_space<vmem>>, vector<1x512xf32>
    %18 = vector.broadcast %17 : vector<1x512xf32> to vector<2x512xf32>
    %19 = arith.addf %16, %18 : vector<2x512xf32>
    %c0_17 = arith.constant 0 : index
    %c0_18 = arith.constant 0 : index
    %20 = vector.load %arg7[%c0_17, %c0_18] : memref<2x512xf32, #tpu.memory_space<vmem>>, vector<2x512xf32>
    tpu.vector_store %arg7[%c0_17, %c0_18], %19 {strides = array<i32>} : memref<2x512xf32, #tpu.memory_space<vmem>>, vector<2x512xf32>,
    return
  }
}

</mosaic_0001>

<llo_original>
// kernel: tpu_custom_call.1
$region0: #{tpu_custom_call.1}
  #allocation0 [shape = 'u32[]', space=smem, size = 0x4, offset = 0x4, fixed_abs, tag = 'smem constant byte address 0x4 - core index']
  #allocation1 [shape = 'u32[144,128]{1,0:T(1,128)}', space=vmem, size = 0x12000, scoped, tag = 'internal scratch']
  %s0 = inlined_call_operand.hbm [shape: f32[2,8], index: 0, kind: input, shape index: {}]
  %s1 = inlined_call_operand.hbm [shape: f32[8,32], index: 1, kind: input, shape index: {}]
  %s2 = inlined_call_operand.vmem [shape: f32[1,32], index: 2, kind: input, shape index: {}]
  %s3 = inlined_call_operand.hbm [shape: f32[32,256], index: 3, kind: input, shape index: {}]
  %s4 = inlined_call_operand.vmem [shape: f32[1,256], index: 4, kind: input, shape index: {}]
  %s5 = inlined_call_operand.hbm [shape: f32[256,512], index: 5, kind: input, shape index: {}]
  %s6 = inlined_call_operand.vmem [shape: f32[1,512], index: 6, kind: input, shape index: {}]
  %s7 = inlined_call_operand.hbm [shape: f32[2,512], index: 7, kind: output, shape index: {}]
  %s8 = sld [smem:[#allocation0]]
  $region54: #{tpu_custom_call.1} parent=0
    _
  %s10 = ssub.s32 1, %s8
  %s11 = scalar_select 0, %s10, %s8
  $region1: #{tpu_custom_call.1} parent=0
    #allocation2 [shape = 'u8[1024]{0}', space=vmem, size = 0x400, scoped, tag = 'input window, operand 0, single buffered']
    #allocation3 [shape = 's32[1]{0}', space=sflag, size = 0x4, scoped, tag = 'scoped memory for tpu_custom_call.1']
    #allocation4 [shape = 's32[1]{0}', space=sflag, size = 0x4, scoped, tag = 'scoped memory for tpu_custom_call.1']
    #allocation5 [shape = 'u8[4096]{0}', space=vmem, size = 0x1000, scoped, tag = 'input window, operand 1, single buffered']
    #allocation6 [shape = 's32[1]{0}', space=sflag, size = 0x4, scoped, tag = 'scoped memory for tpu_custom_call.1']
    #allocation7 [shape = 'u8[32768]{0}', space=vmem, size = 0x8000, scoped, tag = 'input window, operand 3, single buffered']
    #allocation8 [shape = 'u8[524288]{0}', space=vmem, size = 0x80000, scoped, tag = 'input window, operand 5, single buffered']
    #allocation9 [shape = 's32[1]{0}', space=sflag, size = 0x4, scoped, tag = 'scoped memory for tpu_custom_call.1']
    #allocation10 [shape = 'u8[4096]{0}', space=vmem, size = 0x1000, scoped, tag = 'output window, operand 0, single buffered']
    %12 = vsyncpa [#allocation3], 0
    %13 = vsyncpa [#allocation6], 0
    %14 = vsyncpa [#allocation9], 0
    %15 = vsyncpa [#allocation4], 0
    // Predicated region
    $region2: #{tpu_custom_call.1} parent=1 // pred_check
      _
    $region3: #{tpu_custom_call.1} parent=1 // pred_check_branch
      %17 = sbr.rel (0) target = $region5
    $region4: #{tpu_custom_call.1} parent=1 // pred_region
      %s19 = ssub.s32 32, 32
      %20 = vsyncadd [#allocation3], %s19
      %s22 = sshll.u32 [#allocation2], 4
      %s23 = int_to_ptr.vmem [resolvable:$true] %s22
      %25 = dma.hbm_to_vmem [thread:$0]  %s0, 32, %s23, [#allocation3]
    $region5: #{tpu_custom_call.1} parent=1 // pred_fallthru
      _
    // Predicated region
    $region6: #{tpu_custom_call.1} parent=1 // pred_check
      _
    $region7: #{tpu_custom_call.1} parent=1 // pred_check_branch
      %27 = sbr.rel (0) target = $region9
    $region8: #{tpu_custom_call.1} parent=1 // pred_region
      %s29 = ssub.s32 128, 128
      %30 = vsyncadd [#allocation6], %s29
      %s32 = sshll.u32 [#allocation5], 4
      %s33 = int_to_ptr.vmem [resolvable:$true] %s32
      %35 = dma.hbm_to_vmem [thread:$0]  %s1, 128, %s33, [#allocation6]
    $region9: #{tpu_custom_call.1} parent=1 // pred_fallthru
      _
    // Predicated region
    $region10: #{tpu_custom_call.1} parent=1 // pred_check
      _
    $region11: #{tpu_custom_call.1} parent=1 // pred_check_branch
      %37 = sbr.rel (0) target = $region13
    $region12: #{tpu_custom_call.1} parent=1 // pred_region
      _
    $region13: #{tpu_custom_call.1} parent=1 // pred_fallthru
      _
    // Predicated region
    $region14: #{tpu_custom_call.1} parent=1 // pred_check
      _
    $region15: #{tpu_custom_call.1} parent=1 // pred_check_branch
      %39 = sbr.rel (0) target = $region17
    $region16: #{tpu_custom_call.1} parent=1 // pred_region
      %s41 = ssub.s32 1024, 1024
      %42 = vsyncadd [#allocation6], %s41
      %s43 = sshll.u32 [#allocation7], 4
      %s44 = int_to_ptr.vmem [resolvable:$true] %s43
      %49 = dma.hbm_to_vmem [thread:$0]  %s3, 1024, %s44, [#allocation6], 256, 256, 16
    $region17: #{tpu_custom_call.1} parent=1 // pred_fallthru
      _
    // Predicated region
    $region18: #{tpu_custom_call.1} parent=1 // pred_check
      _
    $region19: #{tpu_custom_call.1} parent=1 // pred_check_branch
      %51 = sbr.rel (0) target = $region21
    $region20: #{tpu_custom_call.1} parent=1 // pred_region
      _
    $region21: #{tpu_custom_call.1} parent=1 // pred_fallthru
      _
    // Predicated region
    $region22: #{tpu_custom_call.1} parent=1 // pred_check
      _
    $region23: #{tpu_custom_call.1} parent=1 // pred_check_branch
      %53 = sbr.rel (0) target = $region25
    $region24: #{tpu_custom_call.1} parent=1 // pred_region
      %s55 = ssub.s32 16384, 16384
      %56 = vsyncadd [#allocation9], %s55
      %s57 = sshll.u32 [#allocation8], 4
      %s58 = int_to_ptr.vmem [resolvable:$true] %s57
      %63 = dma.hbm_to_vmem [thread:$0]  %s5, 16384, %s58, [#allocation9], 512, 512, 32
    $region25: #{tpu_custom_call.1} parent=1 // pred_fallthru
      _
    // Predicated region
    $region26: #{tpu_custom_call.1} parent=1 // pred_check
      _
    $region27: #{tpu_custom_call.1} parent=1 // pred_check_branch
      %65 = sbr.rel (0) target = $region29
    $region28: #{tpu_custom_call.1} parent=1 // pred_region
      _
    $region29: #{tpu_custom_call.1} parent=1 // pred_fallthru
      _
    // Predicated region
    $region30: #{tpu_custom_call.1} parent=1 // pred_check
      _
    $region31: #{tpu_custom_call.1} parent=1 // pred_check_branch
      %67 = sbr.rel (0) target = $region33
    $region32: #{tpu_custom_call.1} parent=1 // pred_region
      %68 = dma.done [#allocation3], 32
    $region33: #{tpu_custom_call.1} parent=1 // pred_fallthru
      _
    // Predicated region
    $region34: #{tpu_custom_call.1} parent=1 // pred_check
      _
    $region35: #{tpu_custom_call.1} parent=1 // pred_check_branch
      %70 = sbr.rel (0) target = $region37
    $region36: #{tpu_custom_call.1} parent=1 // pred_region
      %71 = dma.done [#allocation6], 128
    $region37: #{tpu_custom_call.1} parent=1 // pred_fallthru
      _
    // Predicated region
    $region38: #{tpu_custom_call.1} parent=1 // pred_check
      _
    $region39: #{tpu_custom_call.1} parent=1 // pred_check_branch
      %73 = sbr.rel (0) target = $region41
    $region40: #{tpu_custom_call.1} parent=1 // pred_region
      %74 = dma.done [#allocation6], 1024
    $region41: #{tpu_custom_call.1} parent=1 // pred_fallthru
      _
    // Predicated region
    $region42: #{tpu_custom_call.1} parent=1 // pred_check
      _
    $region43: #{tpu_custom_call.1} parent=1 // pred_check_branch
      %76 = sbr.rel (0) target = $region45
    $region44: #{tpu_custom_call.1} parent=1 // pred_region
      %77 = dma.done [#allocation9], 16384
    $region45: #{tpu_custom_call.1} parent=1 // pred_fallthru
      _
    %v78 = vld [vmem:[#allocation2] sm:$0x3]
    %v79 = vld [vmem:[#allocation5] sm:$0xff]
    %v80 = vld [vmem:[%s2] sm:$0x1]
    %v82 = vlaneseq
    %v83 = vshrl.u32 %v82, 7
    %v84 = vsub.s32 0, %v83
    %v85 = vrot.slane %v80, %v84
    %vm87 = vcmask 64512
    %v89 = vsel %vm87, %v78, 0
    %91 = vmatprep.subr.mxu0 0.0
    %92 = vmatpush1.msra.mxu0 %v79
    %93 = vmatprep.subr.mxu0 0.0
    %94 = vmatpush1.msra.mxu0 0.0
    %95 = vmatprep.subr.mxu0 0.0
    %96 = vmatpush1.msra.mxu0 0.0
    %97 = vmatprep.subr.mxu0 0.0
    %98 = vmatpush1.msra.mxu0 0.0
    %99 = vmatprep.subr.mxu0 0.0
    %100 = vmatpush1.msra.mxu0 0.0
    %101 = vmatprep.subr.mxu0 0.0
    %102 = vmatpush1.msra.mxu0 0.0
    %103 = vmatprep.subr.mxu0 0.0
    %104 = vmatpush1.msra.mxu0 0.0
    %105 = vmatprep.subr.mxu0 0.0
    %106 = vmatpush1.msra.mxu0 0.0
    %107 = vmatprep.subr.mxu0 0.0
    %108 = vmatpush1.msra.mxu0 0.0
    %109 = vmatprep.subr.mxu0 0.0
    %110 = vmatpush1.msra.mxu0 0.0
    %111 = vmatprep.subr.mxu0 0.0
    %112 = vmatpush1.msra.mxu0 0.0
    %113 = vmatprep.subr.mxu0 0.0
    %114 = vmatpush1.msra.mxu0 0.0
    %115 = vmatprep.subr.mxu0 0.0
    %116 = vmatpush1.msra.mxu0 0.0
    %117 = vmatprep.subr.mxu0 0.0
    %118 = vmatpush1.msra.mxu0 0.0
    %119 = vmatprep.subr.mxu0 0.0
    %120 = vmatpush1.msra.mxu0 0.0
    %121 = vmatprep.subr.mxu0 0.0
    %122 = vmatpush1.msra.mxu0 0.0
    %123 = vmatprep.subr.mxu0 0.0
    %124 = vmatpush1.msra.mxu0 0.0
    %125 = vmatprep.subr.mxu0 0.0
    %126 = vmatpush1.msra.mxu0 0.0
    %127 = vmatprep.subr.mxu0 0.0
    %128 = vmatpush1.msra.mxu0 0.0
    %129 = vmatprep.subr.mxu0 0.0
    %130 = vmatpush1.msra.mxu0 0.0
    %131 = vmatprep.subr.mxu0 0.0
    %132 = vmatpush1.msra.mxu0 0.0
    %133 = vmatprep.subr.mxu0 0.0
    %134 = vmatpush1.msra.mxu0 0.0
    %135 = vmatprep.subr.mxu0 0.0
    %136 = vmatpush1.msra.mxu0 0.0
    %137 = vmatprep.subr.mxu0 0.0
    %138 = vmatpush1.msra.mxu0 0.0
    %139 = vmatprep.subr.mxu0 0.0
    %140 = vmatpush1.msra.mxu0 0.0
    %141 = vmatprep.subr.mxu0 0.0
    %142 = vmatpush1.msra.mxu0 0.0
    %143 = vmatprep.subr.mxu0 0.0
    %144 = vmatpush1.msra.mxu0 0.0
    %145 = vmatprep.subr.mxu0 0.0
    %146 = vmatpush1.msra.mxu0 0.0
    %147 = vmatprep.subr.mxu0 0.0
    %148 = vmatpush1.msra.mxu0 0.0
    %149 = vmatprep.subr.mxu0 0.0
    %150 = vmatpush1.msra.mxu0 0.0
    %151 = vmatprep.subr.mxu0 0.0
    %152 = vmatpush1.msra.mxu0 0.0
    %153 = vmatprep.subr.mxu0 0.0
    %154 = vmatpush1.msra.mxu0 0.0
    %155 = vmatprep.mubr.f32.mxu0 0.0
    %156 = vmatmul.mubr.f32.gmra.mrb[0].mxu0 %v89
    %v157 = vpop.f32.mrb[0].mxu0
    %v158 = vadd.f32 %v85, %v157
    %v159 = vpop.f32.mrb[0].mxu0
    %160 = vdwg.mxu0
    %v161 = vmax.f32 %v158, 0.0
    %v162 = vld [vmem:[#allocation7] sm:$0xff]
    %v163 = vld [vmem:[#allocation7 + $0x8] sm:$0xff]
    %v164 = vld [vmem:[#allocation7 + $0x10] sm:$0xff]
    %v165 = vld [vmem:[#allocation7 + $0x18] sm:$0xff]
    %v166 = vld [vmem:[#allocation7 + $0x20] sm:$0xff]
    %v167 = vld [vmem:[#allocation7 + $0x28] sm:$0xff]
    %v168 = vld [vmem:[#allocation7 + $0x30] sm:$0xff]
    %v169 = vld [vmem:[#allocation7 + $0x38] sm:$0xff]
    %v170 = vld [vmem:[%s4] sm:$0x3]
    %v172 = vlaneseq
    %v173 = vshrl.u32 %v172, 7
    %v174 = vsub.s32 0, %v173
    %v175 = vrot.slane %v170, %v174
    %v176 = vlaneseq
    %v177 = vshrl.u32 %v176, 7
    %v178 = vsub.s32 1, %v177
    %v179 = vrot.slane %v170, %v178
    %vm182 = vcmask 261120
    %v184 = vsel %vm182, %v161, 0
    %186 = vmatprep.subr.mxu0 %v163
    %187 = vmatpush1.msra.mxu0 %v162
    %188 = vmatprep.subr.mxu0 %v165
    %189 = vmatpush1.msra.mxu0 %v164
    %190 = vmatprep.subr.mxu0 %v167
    %191 = vmatpush1.msra.mxu0 %v166
    %192 = vmatprep.subr.mxu0 %v169
    %193 = vmatpush1.msra.mxu0 %v168
    %194 = vmatprep.subr.mxu0 0.0
    %195 = vmatpush1.msra.mxu0 0.0
    %196 = vmatprep.subr.mxu0 0.0
    %197 = vmatpush1.msra.mxu0 0.0
    %198 = vmatprep.subr.mxu0 0.0
    %199 = vmatpush1.msra.mxu0 0.0
    %200 = vmatprep.subr.mxu0 0.0
    %201 = vmatpush1.msra.mxu0 0.0
    %202 = vmatprep.subr.mxu0 0.0
    %203 = vmatpush1.msra.mxu0 0.0
    %204 = vmatprep.subr.mxu0 0.0
    %205 = vmatpush1.msra.mxu0 0.0
    %206 = vmatprep.subr.mxu0 0.0
    %207 = vmatpush1.msra.mxu0 0.0
    %208 = vmatprep.subr.mxu0 0.0
    %209 = vmatpush1.msra.mxu0 0.0
    %210 = vmatprep.subr.mxu0 0.0
    %211 = vmatpush1.msra.mxu0 0.0
    %212 = vmatprep.subr.mxu0 0.0
    %213 = vmatpush1.msra.mxu0 0.0
    %214 = vmatprep.subr.mxu0 0.0
    %215 = vmatpush1.msra.mxu0 0.0
    %216 = vmatprep.subr.mxu0 0.0
    %217 = vmatpush1.msra.mxu0 0.0
    %218 = vmatprep.subr.mxu0 0.0
    %219 = vmatpush1.msra.mxu0 0.0
    %220 = vmatprep.subr.mxu0 0.0
    %221 = vmatpush1.msra.mxu0 0.0
    %222 = vmatprep.subr.mxu0 0.0
    %223 = vmatpush1.msra.mxu0 0.0
    %224 = vmatprep.subr.mxu0 0.0
    %225 = vmatpush1.msra.mxu0 0.0
    %226 = vmatprep.subr.mxu0 0.0
    %227 = vmatpush1.msra.mxu0 0.0
    %228 = vmatprep.subr.mxu0 0.0
    %229 = vmatpush1.msra.mxu0 0.0
    %230 = vmatprep.subr.mxu0 0.0
    %231 = vmatpush1.msra.mxu0 0.0
    %232 = vmatprep.subr.mxu0 0.0
    %233 = vmatpush1.msra.mxu0 0.0
    %234 = vmatprep.subr.mxu0 0.0
    %235 = vmatpush1.msra.mxu0 0.0
    %236 = vmatprep.subr.mxu0 0.0
    %237 = vmatpush1.msra.mxu0 0.0
    %238 = vmatprep.subr.mxu0 0.0
    %239 = vmatpush1.msra.mxu0 0.0
    %240 = vmatprep.subr.mxu0 0.0
    %241 = vmatpush1.msra.mxu0 0.0
    %242 = vmatprep.subr.mxu0 0.0
    %243 = vmatpush1.msra.mxu0 0.0
    %244 = vmatprep.subr.mxu0 0.0
    %245 = vmatpush1.msra.mxu0 0.0
    %246 = vmatprep.subr.mxu0 0.0
    %247 = vmatpush1.msra.mxu0 0.0
    %248 = vmatprep.subr.mxu0 0.0
    %249 = vmatpush1.msra.mxu0 0.0
    %250 = vmatprep.mubr.f32.mxu0 0.0
    %251 = vmatmul.mubr.f32.gmra.mrb[0].mxu0 %v184
    %v252 = vpop.f32.mrb[0].mxu0
    %v253 = vadd.f32 %v175, %v252
    %v254 = vpop.f32.mrb[0].mxu0
    %v255 = vadd.f32 %v179, %v254
    %256 = vdwg.mxu0
    %v257 = vmax.f32 %v253, 0.0
    %v258 = vmax.f32 %v255, 0.0
    %v259 = vld [vmem:[#allocation8] sm:$0xff]
    %v260 = vld [vmem:[#allocation8 + $0x8] sm:$0xff]
    %v261 = vld [vmem:[#allocation8 + $0x10] sm:$0xff]
    %v262 = vld [vmem:[#allocation8 + $0x18] sm:$0xff]
    %v263 = vld [vmem:[#allocation8 + $0x20] sm:$0xff]
    %v264 = vld [vmem:[#allocation8 + $0x28] sm:$0xff]
    %v265 = vld [vmem:[#allocation8 + $0x30] sm:$0xff]
    %v266 = vld [vmem:[#allocation8 + $0x38] sm:$0xff]
    %v267 = vld [vmem:[#allocation8 + $0x40] sm:$0xff]
    %v268 = vld [vmem:[#allocation8 + $0x48] sm:$0xff]
    %v269 = vld [vmem:[#allocation8 + $0x50] sm:$0xff]
    %v270 = vld [vmem:[#allocation8 + $0x58] sm:$0xff]
    %v271 = vld [vmem:[#allocation8 + $0x60] sm:$0xff]
    %v272 = vld [vmem:[#allocation8 + $0x68] sm:$0xff]
    %v273 = vld [vmem:[#allocation8 + $0x70] sm:$0xff]
    %v274 = vld [vmem:[#allocation8 + $0x78] sm:$0xff]
    %v275 = vld [vmem:[#allocation8 + $0x80] sm:$0xff]
    %v276 = vld [vmem:[#allocation8 + $0x88] sm:$0xff]
    %v277 = vld [vmem:[#allocation8 + $0x90] sm:$0xff]
    %v278 = vld [vmem:[#allocation8 + $0x98] sm:$0xff]
    %v279 = vld [vmem:[#allocation8 + $0xa0] sm:$0xff]
    %v280 = vld [vmem:[#allocation8 + $0xa8] sm:$0xff]
    %v281 = vld [vmem:[#allocation8 + $0xb0] sm:$0xff]
    %v282 = vld [vmem:[#allocation8 + $0xb8] sm:$0xff]
    %v283 = vld [vmem:[#allocation8 + $0xc0] sm:$0xff]
    %v284 = vld [vmem:[#allocation8 + $0xc8] sm:$0xff]
    %v285 = vld [vmem:[#allocation8 + $0xd0] sm:$0xff]
    %v286 = vld [vmem:[#allocation8 + $0xd8] sm:$0xff]
    %v287 = vld [vmem:[#allocation8 + $0xe0] sm:$0xff]
    %v288 = vld [vmem:[#allocation8 + $0xe8] sm:$0xff]
    %v289 = vld [vmem:[#allocation8 + $0xf0] sm:$0xff]
    %v290 = vld [vmem:[#allocation8 + $0xf8] sm:$0xff]
    %v291 = vld [vmem:[#allocation8 + $0x100] sm:$0xff]
    %v292 = vld [vmem:[#allocation8 + $0x108] sm:$0xff]
    %v293 = vld [vmem:[#allocation8 + $0x110] sm:$0xff]
    %v294 = vld [vmem:[#allocation8 + $0x118] sm:$0xff]
    %v295 = vld [vmem:[#allocation8 + $0x120] sm:$0xff]
    %v296 = vld [vmem:[#allocation8 + $0x128] sm:$0xff]
    %v297 = vld [vmem:[#allocation8 + $0x130] sm:$0xff]
    %v298 = vld [vmem:[#allocation8 + $0x138] sm:$0xff]
    %v299 = vld [vmem:[#allocation8 + $0x140] sm:$0xff]
    %v300 = vld [vmem:[#allocation8 + $0x148] sm:$0xff]
    %v301 = vld [vmem:[#allocation8 + $0x150] sm:$0xff]
    %v302 = vld [vmem:[#allocation8 + $0x158] sm:$0xff]
    %v303 = vld [vmem:[#allocation8 + $0x160] sm:$0xff]
    %v304 = vld [vmem:[#allocation8 + $0x168] sm:$0xff]
    %v305 = vld [vmem:[#allocation8 + $0x170] sm:$0xff]
    %v306 = vld [vmem:[#allocation8 + $0x178] sm:$0xff]
    %v307 = vld [vmem:[#allocation8 + $0x180] sm:$0xff]
    %v308 = vld [vmem:[#allocation8 + $0x188] sm:$0xff]
    %v309 = vld [vmem:[#allocation8 + $0x190] sm:$0xff]
    %v310 = vld [vmem:[#allocation8 + $0x198] sm:$0xff]
    %v311 = vld [vmem:[#allocation8 + $0x1a0] sm:$0xff]
    %v312 = vld [vmem:[#allocation8 + $0x1a8] sm:$0xff]
    %v313 = vld [vmem:[#allocation8 + $0x1b0] sm:$0xff]
    %v314 = vld [vmem:[#allocation8 + $0x1b8] sm:$0xff]
    %v315 = vld [vmem:[#allocation8 + $0x1c0] sm:$0xff]
    %v316 = vld [vmem:[#allocation8 + $0x1c8] sm:$0xff]
    %v317 = vld [vmem:[#allocation8 + $0x1d0] sm:$0xff]
    %v318 = vld [vmem:[#allocation8 + $0x1d8] sm:$0xff]
    %v319 = vld [vmem:[#allocation8 + $0x1e0] sm:$0xff]
    %v320 = vld [vmem:[#allocation8 + $0x1e8] sm:$0xff]
    %v321 = vld [vmem:[#allocation8 + $0x1f0] sm:$0xff]
    %v322 = vld [vmem:[#allocation8 + $0x1f8] sm:$0xff]
    %v323 = vld [vmem:[#allocation8 + $0x200] sm:$0xff]
    %v324 = vld [vmem:[#allocation8 + $0x208] sm:$0xff]
    %v325 = vld [vmem:[#allocation8 + $0x210] sm:$0xff]
    %v326 = vld [vmem:[#allocation8 + $0x218] sm:$0xff]
    %v327 = vld [vmem:[#allocation8 + $0x220] sm:$0xff]
    %v328 = vld [vmem:[#allocation8 + $0x228] sm:$0xff]
    %v329 = vld [vmem:[#allocation8 + $0x230] sm:$0xff]
    %v330 = vld [vmem:[#allocation8 + $0x238] sm:$0xff]
    %v331 = vld [vmem:[#allocation8 + $0x240] sm:$0xff]
    %v332 = vld [vmem:[#allocation8 + $0x248] sm:$0xff]
    %v333 = vld [vmem:[#allocation8 + $0x250] sm:$0xff]
    %v334 = vld [vmem:[#allocation8 + $0x258] sm:$0xff]
    %v335 = vld [vmem:[#allocation8 + $0x260] sm:$0xff]
    %v336 = vld [vmem:[#allocation8 + $0x268] sm:$0xff]
    %v337 = vld [vmem:[#allocation8 + $0x270] sm:$0xff]
    %v338 = vld [vmem:[#allocation8 + $0x278] sm:$0xff]
    %v339 = vld [vmem:[#allocation8 + $0x280] sm:$0xff]
    %v340 = vld [vmem:[#allocation8 + $0x288] sm:$0xff]
    %v341 = vld [vmem:[#allocation8 + $0x290] sm:$0xff]
    %v342 = vld [vmem:[#allocation8 + $0x298] sm:$0xff]
    %v343 = vld [vmem:[#allocation8 + $0x2a0] sm:$0xff]
    %v344 = vld [vmem:[#allocation8 + $0x2a8] sm:$0xff]
    %v345 = vld [vmem:[#allocation8 + $0x2b0] sm:$0xff]
    %v346 = vld [vmem:[#allocation8 + $0x2b8] sm:$0xff]
    %v347 = vld [vmem:[#allocation8 + $0x2c0] sm:$0xff]
    %v348 = vld [vmem:[#allocation8 + $0x2c8] sm:$0xff]
    %v349 = vld [vmem:[#allocation8 + $0x2d0] sm:$0xff]
    %v350 = vld [vmem:[#allocation8 + $0x2d8] sm:$0xff]
    %v351 = vld [vmem:[#allocation8 + $0x2e0] sm:$0xff]
    %v352 = vld [vmem:[#allocation8 + $0x2e8] sm:$0xff]
    %v353 = vld [vmem:[#allocation8 + $0x2f0] sm:$0xff]
    %v354 = vld [vmem:[#allocation8 + $0x2f8] sm:$0xff]
    %v355 = vld [vmem:[#allocation8 + $0x300] sm:$0xff]
    %v356 = vld [vmem:[#allocation8 + $0x308] sm:$0xff]
    %v357 = vld [vmem:[#allocation8 + $0x310] sm:$0xff]
    %v358 = vld [vmem:[#allocation8 + $0x318] sm:$0xff]
    %v359 = vld [vmem:[#allocation8 + $0x320] sm:$0xff]
    %v360 = vld [vmem:[#allocation8 + $0x328] sm:$0xff]
    %v361 = vld [vmem:[#allocation8 + $0x330] sm:$0xff]
    %v362 = vld [vmem:[#allocation8 + $0x338] sm:$0xff]
    %v363 = vld [vmem:[#allocation8 + $0x340] sm:$0xff]
    %v364 = vld [vmem:[#allocation8 + $0x348] sm:$0xff]
    %v365 = vld [vmem:[#allocation8 + $0x350] sm:$0xff]
    %v366 = vld [vmem:[#allocation8 + $0x358] sm:$0xff]
    %v367 = vld [vmem:[#allocation8 + $0x360] sm:$0xff]
    %v368 = vld [vmem:[#allocation8 + $0x368] sm:$0xff]
    %v369 = vld [vmem:[#allocation8 + $0x370] sm:$0xff]
    %v370 = vld [vmem:[#allocation8 + $0x378] sm:$0xff]
    %v371 = vld [vmem:[#allocation8 + $0x380] sm:$0xff]
    %v372 = vld [vmem:[#allocation8 + $0x388] sm:$0xff]
    %v373 = vld [vmem:[#allocation8 + $0x390] sm:$0xff]
    %v374 = vld [vmem:[#allocation8 + $0x398] sm:$0xff]
    %v375 = vld [vmem:[#allocation8 + $0x3a0] sm:$0xff]
    %v376 = vld [vmem:[#allocation8 + $0x3a8] sm:$0xff]
    %v377 = vld [vmem:[#allocation8 + $0x3b0] sm:$0xff]
    %v378 = vld [vmem:[#allocation8 + $0x3b8] sm:$0xff]
    %v379 = vld [vmem:[#allocation8 + $0x3c0] sm:$0xff]
    %v380 = vld [vmem:[#allocation8 + $0x3c8] sm:$0xff]
    %v381 = vld [vmem:[#allocation8 + $0x3d0] sm:$0xff]
    %v382 = vld [vmem:[#allocation8 + $0x3d8] sm:$0xff]
    %v383 = vld [vmem:[#allocation8 + $0x3e0] sm:$0xff]
    %v384 = vld [vmem:[#allocation8 + $0x3e8] sm:$0xff]
    %v385 = vld [vmem:[#allocation8 + $0x3f0] sm:$0xff]
    %v386 = vld [vmem:[#allocation8 + $0x3f8] sm:$0xff]
    %v387 = vld [vmem:[%s6] sm:$0xf]
    %v389 = vlaneseq
    %v390 = vshrl.u32 %v389, 7
    %v391 = vsub.s32 0, %v390
    %v392 = vrot.slane %v387, %v391
    %v393 = vlaneseq
    %v394 = vshrl.u32 %v393, 7
    %v395 = vsub.s32 1, %v394
    %v396 = vrot.slane %v387, %v395
    %v397 = vlaneseq
    %v398 = vshrl.u32 %v397, 7
    %v399 = vsub.s32 2, %v398
    %v400 = vrot.slane %v387, %v399
    %v401 = vlaneseq
    %v402 = vshrl.u32 %v401, 7
    %v403 = vsub.s32 3, %v402
    %v404 = vrot.slane %v387, %v403
    %409 = vmatprep.subr.mxu0 %v260
    %410 = vmatpush1.msra.mxu0 %v259
    %411 = vmatprep.subr.mxu0 %v264
    %412 = vmatpush1.msra.mxu0 %v263
    %413 = vmatprep.subr.mxu0 %v268
    %414 = vmatpush1.msra.mxu0 %v267
    %415 = vmatprep.subr.mxu0 %v272
    %416 = vmatpush1.msra.mxu0 %v271
    %417 = vmatprep.subr.mxu0 %v276
    %418 = vmatpush1.msra.mxu0 %v275
    %419 = vmatprep.subr.mxu0 %v280
    %420 = vmatpush1.msra.mxu0 %v279
    %421 = vmatprep.subr.mxu0 %v284
    %422 = vmatpush1.msra.mxu0 %v283
    %423 = vmatprep.subr.mxu0 %v288
    %424 = vmatpush1.msra.mxu0 %v287
    %425 = vmatprep.subr.mxu0 %v292
    %426 = vmatpush1.msra.mxu0 %v291
    %427 = vmatprep.subr.mxu0 %v296
    %428 = vmatpush1.msra.mxu0 %v295
    %429 = vmatprep.subr.mxu0 %v300
    %430 = vmatpush1.msra.mxu0 %v299
    %431 = vmatprep.subr.mxu0 %v304
    %432 = vmatpush1.msra.mxu0 %v303
    %433 = vmatprep.subr.mxu0 %v308
    %434 = vmatpush1.msra.mxu0 %v307
    %435 = vmatprep.subr.mxu0 %v312
    %436 = vmatpush1.msra.mxu0 %v311
    %437 = vmatprep.subr.mxu0 %v316
    %438 = vmatpush1.msra.mxu0 %v315
    %439 = vmatprep.subr.mxu0 %v320
    %440 = vmatpush1.msra.mxu0 %v319
    %441 = vmatprep.subr.mxu0 %v324
    %442 = vmatpush1.msra.mxu0 %v323
    %443 = vmatprep.subr.mxu0 %v328
    %444 = vmatpush1.msra.mxu0 %v327
    %445 = vmatprep.subr.mxu0 %v332
    %446 = vmatpush1.msra.mxu0 %v331
    %447 = vmatprep.subr.mxu0 %v336
    %448 = vmatpush1.msra.mxu0 %v335
    %449 = vmatprep.subr.mxu0 %v340
    %450 = vmatpush1.msra.mxu0 %v339
    %451 = vmatprep.subr.mxu0 %v344
    %452 = vmatpush1.msra.mxu0 %v343
    %453 = vmatprep.subr.mxu0 %v348
    %454 = vmatpush1.msra.mxu0 %v347
    %455 = vmatprep.subr.mxu0 %v352
    %456 = vmatpush1.msra.mxu0 %v351
    %457 = vmatprep.subr.mxu0 %v356
    %458 = vmatpush1.msra.mxu0 %v355
    %459 = vmatprep.subr.mxu0 %v360
    %460 = vmatpush1.msra.mxu0 %v359
    %461 = vmatprep.subr.mxu0 %v364
    %462 = vmatpush1.msra.mxu0 %v363
    %463 = vmatprep.subr.mxu0 %v368
    %464 = vmatpush1.msra.mxu0 %v367
    %465 = vmatprep.subr.mxu0 %v372
    %466 = vmatpush1.msra.mxu0 %v371
    %467 = vmatprep.subr.mxu0 %v376
    %468 = vmatpush1.msra.mxu0 %v375
    %469 = vmatprep.subr.mxu0 %v380
    %470 = vmatpush1.msra.mxu0 %v379
    %471 = vmatprep.subr.mxu0 %v384
    %472 = vmatpush1.msra.mxu0 %v383
    %473 = vmatprep.mubr.f32.mxu0 %v258
    %474 = vmatmul.mubr.f32.gmra.mrb[0].mxu0 %v257
    %v475 = vpop.f32.mrb[0].mxu0
    %v476 = vadd.f32 %v392, %v475
    %v477 = vpop.f32.mrb[0].mxu0
    %v478 = vadd.f32 %v396, %v477
    %479 = vdwg.mxu0
    %480 = vmatprep.subr.mxu0 %v262
    %481 = vmatpush1.msra.mxu0 %v261
    %482 = vmatprep.subr.mxu0 %v266
    %483 = vmatpush1.msra.mxu0 %v265
    %484 = vmatprep.subr.mxu0 %v270
    %485 = vmatpush1.msra.mxu0 %v269
    %486 = vmatprep.subr.mxu0 %v274
    %487 = vmatpush1.msra.mxu0 %v273
    %488 = vmatprep.subr.mxu0 %v278
    %489 = vmatpush1.msra.mxu0 %v277
    %490 = vmatprep.subr.mxu0 %v282
    %491 = vmatpush1.msra.mxu0 %v281
    %492 = vmatprep.subr.mxu0 %v286
    %493 = vmatpush1.msra.mxu0 %v285
    %494 = vmatprep.subr.mxu0 %v290
    %495 = vmatpush1.msra.mxu0 %v289
    %496 = vmatprep.subr.mxu0 %v294
    %497 = vmatpush1.msra.mxu0 %v293
    %498 = vmatprep.subr.mxu0 %v298
    %499 = vmatpush1.msra.mxu0 %v297
    %500 = vmatprep.subr.mxu0 %v302
    %501 = vmatpush1.msra.mxu0 %v301
    %502 = vmatprep.subr.mxu0 %v306
    %503 = vmatpush1.msra.mxu0 %v305
    %504 = vmatprep.subr.mxu0 %v310
    %505 = vmatpush1.msra.mxu0 %v309
    %506 = vmatprep.subr.mxu0 %v314
    %507 = vmatpush1.msra.mxu0 %v313
    %508 = vmatprep.subr.mxu0 %v318
    %509 = vmatpush1.msra.mxu0 %v317
    %510 = vmatprep.subr.mxu0 %v322
    %511 = vmatpush1.msra.mxu0 %v321
    %512 = vmatprep.subr.mxu0 %v326
    %513 = vmatpush1.msra.mxu0 %v325
    %514 = vmatprep.subr.mxu0 %v330
    %515 = vmatpush1.msra.mxu0 %v329
    %516 = vmatprep.subr.mxu0 %v334
    %517 = vmatpush1.msra.mxu0 %v333
    %518 = vmatprep.subr.mxu0 %v338
    %519 = vmatpush1.msra.mxu0 %v337
    %520 = vmatprep.subr.mxu0 %v342
    %521 = vmatpush1.msra.mxu0 %v341
    %522 = vmatprep.subr.mxu0 %v346
    %523 = vmatpush1.msra.mxu0 %v345
    %524 = vmatprep.subr.mxu0 %v350
    %525 = vmatpush1.msra.mxu0 %v349
    %526 = vmatprep.subr.mxu0 %v354
    %527 = vmatpush1.msra.mxu0 %v353
    %528 = vmatprep.subr.mxu0 %v358
    %529 = vmatpush1.msra.mxu0 %v357
    %530 = vmatprep.subr.mxu0 %v362
    %531 = vmatpush1.msra.mxu0 %v361
    %532 = vmatprep.subr.mxu0 %v366
    %533 = vmatpush1.msra.mxu0 %v365
    %534 = vmatprep.subr.mxu0 %v370
    %535 = vmatpush1.msra.mxu0 %v369
    %536 = vmatprep.subr.mxu0 %v374
    %537 = vmatpush1.msra.mxu0 %v373
    %538 = vmatprep.subr.mxu0 %v378
    %539 = vmatpush1.msra.mxu0 %v377
    %540 = vmatprep.subr.mxu0 %v382
    %541 = vmatpush1.msra.mxu0 %v381
    %542 = vmatprep.subr.mxu0 %v386
    %543 = vmatpush1.msra.mxu0 %v385
    %544 = vmatprep.mubr.f32.mxu0 %v258
    %545 = vmatmul.mubr.f32.gmra.mrb[0].mxu0 %v257
    %v546 = vpop.f32.mrb[0].mxu0
    %v547 = vadd.f32 %v400, %v546
    %v548 = vpop.f32.mrb[0].mxu0
    %v549 = vadd.f32 %v404, %v548
    %550 = vdwg.mxu0
    %v555 = vcombine.low %v476, %v478
    %v556 = vcombine.low %v547, %v549
    %v558 = vunpack.c.l.s4 1983009808
    %v559 = vunpack.c.0.s8 %v558
    %v560 = vlaneseq
    %v561 = vshrl.u32 %v560, 7
    %v562 = vsub.s32 %v559, %v561
    %v563 = vrot.slane %v555, %v562
    %v565 = vunpack.c.l.s4 1983009808
    %v566 = vunpack.c.0.s8 %v565
    %v567 = vlaneseq
    %v568 = vshrl.u32 %v567, 7
    %v569 = vsub.s32 %v566, %v568
    %v570 = vrot.slane %v556, %v569
    %v571 = vcombine.low %v563, %v570
    %573 = vst [vmem:[#allocation10] sm:$0xff] %v571
    // Predicated region
    $region46: #{tpu_custom_call.1} parent=1 // pred_check
      _
    $region47: #{tpu_custom_call.1} parent=1 // pred_check_branch
      %575 = sbr.rel (0) target = $region49
    $region48: #{tpu_custom_call.1} parent=1 // pred_region
      %s577 = ssub.s32 128, 128
      %578 = vsyncadd [#allocation4], %s577
      %s580 = sshll.u32 [#allocation10], 4
      %s581 = int_to_ptr.vmem [resolvable:$true] %s580
      %583 = dma.vmem_to_hbm [thread:$0]  %s581, 128, %s7, [#allocation4]
    $region49: #{tpu_custom_call.1} parent=1 // pred_fallthru
      _
    // Predicated region
    $region50: #{tpu_custom_call.1} parent=1 // pred_check
      _
    $region51: #{tpu_custom_call.1} parent=1 // pred_check_branch
      %585 = sbr.rel (0) target = $region53
    $region52: #{tpu_custom_call.1} parent=1 // pred_region
      %586 = dma.done [#allocation4], 128
    $region53: #{tpu_custom_call.1} parent=1 // pred_fallthru
      _
    %587 = vsyncpa [#allocation3], 1
    %588 = vsyncpa [#allocation6], 1
    %589 = vsyncpa [#allocation9], 1
    %590 = vsyncpa [#allocation4], 1

</llo_original>
